<compile_context>
chip_gen: v7x
topology: tpu7x:2x2x1
jax: 0.10.0
libtpu: 0.0.40
codegen_flags: <defaults>
</compile_context>

<pallas_src>
from functools import partial

import jax
import jax.numpy as jnp
from jax.experimental import pallas as pl
from jax.experimental.pallas import tpu as pltpu


def _round_up(x, m):
    return ((x + m - 1) // m) * m


def _epe_partial_kernel(pred_ref, tgt_ref, part_ref, *, tile_s, hw):
    """One (batch, spatial-tile) block -> (8, 128) partial sum of per-pixel norms."""
    t = pl.program_id(1)

    p = pred_ref[...].astype(jnp.float32)   # (1, C, TILE_S, 128)
    g = tgt_ref[...].astype(jnp.float32)
    d = p - g + 1e-16

    # Channel reduction (axis=1): elementwise VPU adds across C vreg slabs.
    sq = jnp.sum(d * d, axis=1)             # (1, TILE_S, 128)
    norms = jnp.sqrt(sq)                    # EUP transcendental

    # Mask out padded spatial positions (lane tail + padded rows) exactly.
    row = jax.lax.broadcasted_iota(jnp.int32, (1, tile_s, 128), 1)
    lane = jax.lax.broadcasted_iota(jnp.int32, (1, tile_s, 128), 2)
    flat = (t * tile_s + row) * 128 + lane
    norms = jnp.where(flat < hw, norms, 0.0)

    # Fold (TILE_S, 128) -> (8, 128): pure VPU adds (no cross-lane reduce here;
    # the single tiny cross-lane reduce happens once in the wrapper).
    part = jnp.sum(norms.reshape(tile_s // 8, 8, 128), axis=0)
    part_ref[...] = part.reshape(1, 1, 8, 128)


def epe_loss(output, target, *, max_tile_rows=512, tile_budget_bytes=1 << 20):
    assert output.shape == target.shape, (output.shape, target.shape)
    N, C, H, W = output.shape
    hw = H * W
    itemsize = jnp.dtype(output.dtype).itemsize

    # ---- choose spatial tiling (TILE_S rows of 128 lanes each) ----
    S = -(-hw // 128)  # ceil(hw / 128)
    budget_rows = max(8, (tile_budget_bytes // (C * 128 * itemsize)) // 8 * 8)
    cap = max(8, (min(max_tile_rows, budget_rows) // 8) * 8)

    if S <= cap:
        tile_s = _round_up(S, 8)            # single spatial tile
    else:
        tile_s = cap
        # Prefer a multiple-of-8 divisor of S (>= cap/4) so no padding copy is needed.
        lower = max(8, (cap // 4) // 8 * 8)
        for cand in range(cap, lower - 1, -8):
            if S % cand == 0:
                tile_s = cand
                break

    s_pad = _round_up(S, tile_s)
    hw_pad = s_pad * 128
    num_tiles = s_pad // tile_s

    # ---- present lane-dense (N, C, S_pad, 128) views of the inputs ----
    def _prep(x):
        x = x.reshape(N, C, hw)
        if hw_pad != hw:
            # One-time pad (zeros); padded positions are masked in-kernel anyway.
            x = jnp.pad(x, ((0, 0), (0, 0), (0, hw_pad - hw)))
        return x.reshape(N, C, s_pad, 128)

    pred4 = _prep(output)
    tgt4 = _prep(target)

    # ---- VMEM budget (explicit; safe on v5e 16 MiB / v6e 32 MiB / v7x 64 MiB) ----
    in_tile_bytes = C * tile_s * 128 * itemsize
    f32_tile_bytes = C * tile_s * 128 * 4
    vmem_limit = int(min(
        48 * 1024 * 1024,
        max(16 * 1024 * 1024,
            4 * in_tile_bytes + 6 * f32_tile_bytes + (2 << 20)),
    ))

    kernel = partial(_epe_partial_kernel, tile_s=tile_s, hw=hw)

    partials = pl.pallas_call(
        kernel,
        out_shape=jax.ShapeDtypeStruct((N, num_tiles, 8, 128), jnp.float32),
        grid=(N, num_tiles),
        in_specs=[
            pl.BlockSpec((1, C, tile_s, 128), lambda n, t: (n, 0, t, 0)),
            pl.BlockSpec((1, C, tile_s, 128), lambda n, t: (n, 0, t, 0)),
        ],
        out_specs=pl.BlockSpec((1, 1, 8, 128), lambda n, t: (n, t, 0, 0)),
        compiler_params=pltpu.CompilerParams(
            # Every grid step writes its own output block -> fully parallel
            # (shards across both v7x TensorCores; harmless on v5e/v6e).
            dimension_semantics=("parallel", "parallel"),
            vmem_limit_bytes=vmem_limit,
        ),
        cost_estimate=pl.CostEstimate(
            flops=int(5 * N * C * hw),
            transcendentals=int(N * hw),
            bytes_accessed=int(2 * N * C * hw_pad * itemsize
                               + N * num_tiles * 8 * 128 * 4),
        ),
    )(pred4, tgt4)

    # Tiny final reduction + normalization (exact denominator N*H*W).
    return jnp.sum(partials) / jnp.float32(N * hw)


def epe_loss_ref(output, target):
    d = output.astype(jnp.float32) - target.astype(jnp.float32) + 1e-16
    return jnp.mean(jnp.sqrt(jnp.sum(d * d, axis=1)))


if __name__ == "__main__":
    key = jax.random.PRNGKey(0)
    k1, k2, k3, k4 = jax.random.split(key, 4)

    # Primary test: typical flow-like tensors (N, C, H, W).
    N, C, H, W = 2, 4, 16, 16
    output = jax.random.normal(k1, (N, C, H, W), dtype=jnp.float32)
    target = jax.random.normal(k2, (N, C, H, W), dtype=jnp.float32)

    loss = epe_loss(output, target)
    jax.block_until_ready(loss)
    ref = epe_loss_ref(output, target)
    assert jnp.allclose(loss, ref, rtol=1e-5, atol=1e-5), (loss, ref)

    # Secondary test: spatial size not a multiple of 128 (exercises masking path).
    o2 = jax.random.normal(k3, (1, 2, 15, 13), dtype=jnp.float32)
    t2 = jax.random.normal(k4, (1, 2, 15, 13), dtype=jnp.float32)
    loss2 = epe_loss(o2, t2)
    jax.block_until_ready(loss2)
    ref2 = epe_loss_ref(o2, t2)
    assert jnp.allclose(loss2, ref2, rtol=1e-5, atol=1e-5), (loss2, ref2)

    print("KERNEL_OK")
</pallas_src>

<mosaic_0001>
module attributes {stable_mosaic.version = 11 : i64} {
  func.func @_epe_partial_kernel(%arg0: i32, %arg1: i32, %arg2: memref<1x4x8x128xf32, #tpu.memory_space<vmem>>, %arg3: memref<1x4x8x128xf32, #tpu.memory_space<vmem>>, %arg4: memref<1x1x8x128xf32, #tpu.memory_space<vmem>>) attributes {dimension_semantics = [#tpu.dimension_semantics<parallel>, #tpu.dimension_semantics<parallel>], iteration_bounds = array<i64: 2, 1>, scalar_prefetch = 0 : i64, scratch_operands = 0 : i64, tpu.core_type = #tpu.core_type<tc>, window_params = [{transform_indices = @transform_0, window_bounds = array<i64: 1, 4, 8, 128>}, {transform_indices = @transform_1, window_bounds = array<i64: 1, 4, 8, 128>}, {transform_indices = @transform_2, window_bounds = array<i64: 1, 1, 8, 128>}]} {
    %c0 = arith.constant 0 : index
    %c0_0 = arith.constant 0 : index
    %c0_1 = arith.constant 0 : index
    %c0_2 = arith.constant 0 : index
    %0 = vector.load %arg2[%c0, %c0_0, %c0_1, %c0_2] : memref<1x4x8x128xf32, #tpu.memory_space<vmem>>, vector<1x4x8x128xf32>
    %c0_3 = arith.constant 0 : index
    %c0_4 = arith.constant 0 : index
    %c0_5 = arith.constant 0 : index
    %c0_6 = arith.constant 0 : index
    %1 = vector.load %arg3[%c0_3, %c0_4, %c0_5, %c0_6] : memref<1x4x8x128xf32, #tpu.memory_space<vmem>>, vector<1x4x8x128xf32>
    %2 = arith.subf %0, %1 : vector<1x4x8x128xf32>
    %cst = arith.constant 1.000000e-16 : f32
    %3 = vector.broadcast %cst : f32 to vector<1x4x8x128xf32>
    %4 = arith.addf %2, %3 : vector<1x4x8x128xf32>
    %5 = arith.mulf %4, %4 : vector<1x4x8x128xf32>
    %cst_7 = arith.constant dense<0.000000e+00> : vector<1x8x128xf32>
    %6 = vector.multi_reduction <add>, %5, %cst_7 [1] : vector<1x4x8x128xf32> to vector<1x8x128xf32>
    %7 = math.sqrt %6 : vector<1x8x128xf32>
    %8 = tpu.iota {dimensions = array<i32: 1>} : vector<1x8x128xi32>
    %9 = tpu.iota {dimensions = array<i32: 2>} : vector<1x8x128xi32>
    %c8_i32 = arith.constant 8 : i32
    %10 = arith.muli %arg1, %c8_i32 : i32
    %11 = vector.broadcast %10 : i32 to vector<1x8x128xi32>
    %12 = arith.addi %11, %8 : vector<1x8x128xi32>
    %c128_i32 = arith.constant 128 : i32
    %13 = vector.broadcast %c128_i32 : i32 to vector<1x8x128xi32>
    %14 = arith.muli %12, %13 : vector<1x8x128xi32>
    %15 = arith.addi %14, %9 : vector<1x8x128xi32>
    %c256_i32 = arith.constant 256 : i32
    %16 = vector.broadcast %c256_i32 : i32 to vector<1x8x128xi32>
    %17 = arith.cmpi slt, %15, %16 : vector<1x8x128xi32>
    %cst_8 = arith.constant 0.000000e+00 : f32
    %18 = vector.broadcast %cst_8 : f32 to vector<1x8x128xf32>
    %19 = arith.select %17, %7, %18 : vector<1x8x128xi1>, vector<1x8x128xf32>
    %cst_9 = arith.constant dense<0.000000e+00> : vector<8x128xf32>
    %20 = vector.multi_reduction <add>, %19, %cst_9 [0] : vector<1x8x128xf32> to vector<8x128xf32>
    %21 = vector.shape_cast %20 : vector<8x128xf32> to vector<1x1x8x128xf32>
    %c0_10 = arith.constant 0 : index
    %c0_11 = arith.constant 0 : index
    %c0_12 = arith.constant 0 : index
    %c0_13 = arith.constant 0 : index
    %22 = vector.load %arg4[%c0_10, %c0_11, %c0_12, %c0_13] : memref<1x1x8x128xf32, #tpu.memory_space<vmem>>, vector<1x1x8x128xf32>
    tpu.vector_store %arg4[%c0_10, %c0_11, %c0_12, %c0_13], %21 {strides = array<i32>} : memref<1x1x8x128xf32, #tpu.memory_space<vmem>>, vector<1x1x8x128xf32>,
    return
  }
  func.func @transform_0(%arg0: i32, %arg1: i32) -> (i32, i32, i32, i32) {
    %c0_i32 = arith.constant 0 : i32
    %c0_i32_0 = arith.constant 0 : i32
    %c0_i32_1 = arith.constant 0 : i32
    return %arg0, %c0_i32, %arg1, %c0_i32_0 : i32, i32, i32, i32
  }
  func.func @transform_1(%arg0: i32, %arg1: i32) -> (i32, i32, i32, i32) {
    %c0_i32 = arith.constant 0 : i32
    %c0_i32_0 = arith.constant 0 : i32
    %c0_i32_1 = arith.constant 0 : i32
    return %arg0, %c0_i32, %arg1, %c0_i32_0 : i32, i32, i32, i32
  }
  func.func @transform_2(%arg0: i32, %arg1: i32) -> (i32, i32, i32, i32) {
    %c0_i32 = arith.constant 0 : i32
    %c0_i32_0 = arith.constant 0 : i32
    %c0_i32_1 = arith.constant 0 : i32
    return %arg0, %arg1, %c0_i32, %c0_i32_0 : i32, i32, i32, i32
  }
}

</mosaic_0001>

<llo_original>
// kernel: tpu_custom_call.1
$region0: #{tpu_custom_call.1}
  #allocation0 [shape = 'u32[]', space=smem, size = 0x4, offset = 0x4, fixed_abs, tag = 'smem constant byte address 0x4 - core index']
  #allocation1 [shape = 'u32[144,128]{1,0:T(1,128)}', space=vmem, size = 0x12000, scoped, tag = 'internal scratch']
  %s0 = inlined_call_operand.hbm [shape: f32[2,4,8,128], index: 0, kind: input, shape index: {}]
  %s1 = inlined_call_operand.hbm [shape: f32[2,4,8,128], index: 1, kind: input, shape index: {}]
  %s2 = inlined_call_operand.hbm [shape: f32[2,1,8,128], index: 2, kind: output, shape index: {}]
  %s3 = sld [smem:[#allocation0]]
  $region49: #{tpu_custom_call.1} parent=0
    _
  %s5 = ssub.s32 1, %s3
  %s6 = scalar_select 0, %s5, %s3
  $region1: #{tpu_custom_call.1} parent=0
    #allocation2 [shape = 'u8[32768]{0}', space=vmem, size = 0x8000, scoped, tag = 'input window, operand 0']
    #allocation3 [shape = 's32[2]{0}', space=sflag, size = 0x8, scoped, tag = 'scoped memory for tpu_custom_call.1']
    #allocation4 [shape = 's32[2]{0}', space=sflag, size = 0x8, scoped, tag = 'scoped memory for tpu_custom_call.1']
    #allocation5 [shape = 'u8[32768]{0}', space=vmem, size = 0x8000, scoped, tag = 'input window, operand 1']
    #allocation6 [shape = 's32[2]{0}', space=sflag, size = 0x8, scoped, tag = 'scoped memory for tpu_custom_call.1']
    #allocation7 [shape = 'u8[8192]{0}', space=vmem, size = 0x2000, scoped, tag = 'output window, operand 0']
    %7 = vsyncpa [#allocation3], 0
    %s8 = scalar_lea.sflag [#allocation3], 1
    %9 = vsyncpa %s8, 0
    %10 = vsyncpa [#allocation6], 0
    %s11 = scalar_lea.sflag [#allocation6], 1
    %12 = vsyncpa %s11, 0
    %13 = vsyncpa [#allocation4], 0
    %s14 = scalar_lea.sflag [#allocation4], 1
    %15 = vsyncpa %s14, 0
    loop: start=0, step=1, limit=4
    $region2: #{tpu_custom_call.1} parent=1 // loop_pre_header
      _
    $region3: #{tpu_custom_call.1} parent=1 // loop_header
      %s17 = sphi 0, %s21
      %p18 = scmp.ge.s32.totalorder %s17, 4
      %s24 = sphi 0, %s36
      %s25 = sphi 0, %s32
      %s26 = sphi 0, %s24
      %s27 = sphi 0, %s25
      %s28 = sphi 0, %s26
      %s29 = sphi 0, %s27
      %s41 = sphi 0, %s43
      %s44 = sphi 0, %s41
      %s45 = sphi 0, %s44
      %s61 = sphi 0, %s45
      %s69 = sphi 0, %s71
      %s72 = sphi 0, %s69
      %s73 = sphi 0, %s72
      %s89 = sphi 0, %s73
      %s97 = sphi 0, %s99
      %s100 = sphi 0, %s97
      %s101 = sphi 0, %s100
      %s117 = sphi 0, %s101
    $region4: #{tpu_custom_call.1} parent=1 // loop_header_branch
      %20 = sbr.rel (%p18) target = $region8
    $region5: #{tpu_custom_call.1} parent=1 // loop_body
      %s22 = ssub.s32 %s17, 1
      %s23 = ssub.s32 %s17, 2
      %s30 = sadd.s32 1, %s25
      %p31 = scmp.ge.s32.totalorder %s30, 1
      %s32 = scalar_select %p31, 0, %s30
      %s33 = sadd.s32 1, %s24
      %s34 = scalar_select %p31, %s33, %s24
      %p35 = scmp.ge.s32.totalorder %s34, 2
      %s36 = scalar_select %p35, 0, %s34
      %s37 = ssub.s32 %s24, %s36
      %s38 = ssub.s32 %s25, %s32
      %s39 = sor.u32 %s37, %s38
      %p40 = scmp.eq.s32.totalorder %s39, 0
      %s42 = sadd.s32 %s41, 1
      %s43 = scalar_select %p40, %s41, %s42
      %p46 = pneg %p40
      %p47 = scmp.eq.s32.totalorder %s17, 1
      %p48 = por %p46, %p47
      %p49 = scmp.ne.s32.totalorder %s41, %s44
      %p50 = scmp.eq.s32.totalorder %s17, 0
      %p51 = por %p49, %p50
      %p52 = scmp.ne.s32.totalorder %s41, %s44
      %p53 = scmp.eq.s32.totalorder %s22, 1
      %p54 = por %p52, %p53
      %p55 = scmp.ne.s32.totalorder %s44, %s45
      %p56 = scmp.eq.s32.totalorder %s22, 0
      %p57 = por %p55, %p56
      %p58 = scmp.ne.s32.totalorder %s44, %s45
      %p59 = scmp.eq.s32.totalorder %s23, 1
      %p60 = por %p58, %p59
      %p62 = scmp.ne.s32.totalorder %s45, %s61
      %p63 = scmp.eq.s32.totalorder %s23, 0
      %p64 = por %p62, %p63
      %s65 = ssub.s32 %s24, %s36
      %s66 = ssub.s32 %s25, %s32
      %s67 = sor.u32 %s65, %s66
      %p68 = scmp.eq.s32.totalorder %s67, 0
      %s70 = sadd.s32 %s69, 1
      %s71 = scalar_select %p68, %s69, %s70
      %p74 = pneg %p68
      %p75 = scmp.eq.s32.totalorder %s17, 1
      %p76 = por %p74, %p75
      %p77 = scmp.ne.s32.totalorder %s69, %s72
      %p78 = scmp.eq.s32.totalorder %s17, 0
      %p79 = por %p77, %p78
      %p80 = scmp.ne.s32.totalorder %s69, %s72
      %p81 = scmp.eq.s32.totalorder %s22, 1
      %p82 = por %p80, %p81
      %p83 = scmp.ne.s32.totalorder %s72, %s73
      %p84 = scmp.eq.s32.totalorder %s22, 0
      %p85 = por %p83, %p84
      %p86 = scmp.ne.s32.totalorder %s72, %s73
      %p87 = scmp.eq.s32.totalorder %s23, 1
      %p88 = por %p86, %p87
      %p90 = scmp.ne.s32.totalorder %s73, %s89
      %p91 = scmp.eq.s32.totalorder %s23, 0
      %p92 = por %p90, %p91
      %s93 = ssub.s32 %s24, %s36
      %s94 = ssub.s32 %s25, %s32
      %s95 = sor.u32 %s93, %s94
      %p96 = scmp.eq.s32.totalorder %s95, 0
      %s98 = sadd.s32 %s97, 1
      %s99 = scalar_select %p96, %s97, %s98
      %p102 = pneg %p96
      %p103 = scmp.eq.s32.totalorder %s17, 1
      %p104 = por %p102, %p103
      %p105 = scmp.ne.s32.totalorder %s97, %s100
      %p106 = scmp.eq.s32.totalorder %s17, 0
      %p107 = por %p105, %p106
      %p108 = scmp.ne.s32.totalorder %s97, %s100
      %p109 = scmp.eq.s32.totalorder %s22, 1
      %p110 = por %p108, %p109
      %p111 = scmp.ne.s32.totalorder %s100, %s101
      %p112 = scmp.eq.s32.totalorder %s22, 0
      %p113 = por %p111, %p112
      %p114 = scmp.ne.s32.totalorder %s100, %s101
      %p115 = scmp.eq.s32.totalorder %s23, 1
      %p116 = por %p114, %p115
      %p118 = scmp.ne.s32.totalorder %s101, %s117
      %p119 = scmp.eq.s32.totalorder %s23, 0
      %p120 = por %p118, %p119
      %p121 = scmp.le.s32.totalorder 1, %s17
      %p122 = scmp.lt.s32.totalorder %s17, 3
      %p123 = pnand %p121, %p122
      %p124 = pneg %p123
      // Predicated region
      $region9: #{tpu_custom_call.1} parent=5 // pred_check
        _
      $region10: #{tpu_custom_call.1} parent=5 // pred_check_branch
        %126 = sbr.rel (%p123) target = $region12
      $region11: #{tpu_custom_call.1} parent=5 // pred_region
        %s127 = ssub.s32 %s17, 1
      $region12: #{tpu_custom_call.1} parent=5 // pred_fallthru
        _
      %p128 = scmp.lt.s32.totalorder %s17, 2
      // Predicated region
      $region13: #{tpu_custom_call.1} parent=5 // pred_check
        %p129 = pneg %p128
      $region14: #{tpu_custom_call.1} parent=5 // pred_check_branch
        %131 = sbr.rel (%p129) target = $region16
      $region15: #{tpu_custom_call.1} parent=5 // pred_region
        // Predicated region
        $region17: #{tpu_custom_call.1} parent=15 // pred_check
          %p132 = pneg %p51
        $region18: #{tpu_custom_call.1} parent=15 // pred_check_branch
          %134 = sbr.rel (%p132) target = $region20
        $region19: #{tpu_custom_call.1} parent=15 // pred_region
          %s135 = sand.u32 %s41, 1
          %s136 = scalar_lea.sflag [#allocation3], %s135
          %s137 = sand.u32 %s41, 1
          %s138 = smul.addr %s137, 32
          %s139 = scalar_lea.vmem [#allocation2], %s138
          %s141 = ssub.s32 512, 512
          %142 = vsyncadd %s136, %s141
          %s143 = smul.addr %s24, 4
          %s144 = sadd.s32 %s25, %s143
          %s145 = smul.addr %s144, 128
          %s146 = scalar_lea.hbm %s0, %s145
          %s147 = sshll.u32 %s139, 4
          %s148 = int_to_ptr.vmem [resolvable:$true] %s147
          %153 = dma.hbm_to_vmem [thread:$0]  %s146, 512, %s148, %s136, 128, 128, 8
        $region20: #{tpu_custom_call.1} parent=15 // pred_fallthru
          _
        // Predicated region
        $region21: #{tpu_custom_call.1} parent=15 // pred_check
          %p154 = pneg %p79
        $region22: #{tpu_custom_call.1} parent=15 // pred_check_branch
          %156 = sbr.rel (%p154) target = $region24
        $region23: #{tpu_custom_call.1} parent=15 // pred_region
          %s157 = sand.u32 %s69, 1
          %s158 = scalar_lea.sflag [#allocation6], %s157
          %s159 = sand.u32 %s69, 1
          %s160 = smul.addr %s159, 32
          %s161 = scalar_lea.vmem [#allocation5], %s160
          %s163 = ssub.s32 512, 512
          %164 = vsyncadd %s158, %s163
          %s165 = smul.addr %s24, 4
          %s166 = sadd.s32 %s25, %s165
          %s167 = smul.addr %s166, 128
          %s168 = scalar_lea.hbm %s1, %s167
          %s169 = sshll.u32 %s161, 4
          %s170 = int_to_ptr.vmem [resolvable:$true] %s169
          %175 = dma.hbm_to_vmem [thread:$0]  %s168, 512, %s170, %s158, 128, 128, 8
        $region24: #{tpu_custom_call.1} parent=15 // pred_fallthru
          _
      $region16: #{tpu_custom_call.1} parent=5 // pred_fallthru
        _
      %p176 = scmp.le.s32.totalorder 1, %s17
      %p177 = scmp.lt.s32.totalorder %s17, 3
      %p178 = pnand %p176, %p177
      %p179 = pneg %p178
      // Predicated region
      $region25: #{tpu_custom_call.1} parent=5 // pred_check
        _
      $region26: #{tpu_custom_call.1} parent=5 // pred_check_branch
        %181 = sbr.rel (%p178) target = $region28
      $region27: #{tpu_custom_call.1} parent=5 // pred_region
        %s182 = ssub.s32 %s17, 1
        %s183 = sand.u32 %s44, 1
        %s184 = scalar_lea.sflag [#allocation3], %s183
        %s185 = sand.u32 %s44, 1
        %s186 = smul.addr %s185, 32
        %s187 = scalar_lea.vmem [#allocation2], %s186
        // Predicated region
        $region29: #{tpu_custom_call.1} parent=27 // pred_check
          %p188 = pneg %p57
        $region30: #{tpu_custom_call.1} parent=27 // pred_check_branch
          %190 = sbr.rel (%p188) target = $region32
        $region31: #{tpu_custom_call.1} parent=27 // pred_region
          %191 = dma.done %s184, 512
        $region32: #{tpu_custom_call.1} parent=27 // pred_fallthru
          _
        %s192 = sand.u32 %s72, 1
        %s193 = scalar_lea.sflag [#allocation6], %s192
        %s194 = sand.u32 %s72, 1
        %s195 = smul.addr %s194, 32
        %s196 = scalar_lea.vmem [#allocation5], %s195
        // Predicated region
        $region33: #{tpu_custom_call.1} parent=27 // pred_check
          %p197 = pneg %p85
        $region34: #{tpu_custom_call.1} parent=27 // pred_check_branch
          %199 = sbr.rel (%p197) target = $region36
        $region35: #{tpu_custom_call.1} parent=27 // pred_region
          %200 = dma.done %s193, 512
        $region36: #{tpu_custom_call.1} parent=27 // pred_fallthru
          _
        %s201 = sand.u32 %s44, 1
        %s202 = scalar_lea.sflag [#allocation3], %s201
        %s203 = sand.u32 %s44, 1
        %s204 = smul.addr %s203, 32
        %s205 = scalar_lea.vmem [#allocation2], %s204
        %p206 = pneg %p57
        %p207 = pneg %p54
        %s208 = sand.u32 %s72, 1
        %s209 = scalar_lea.sflag [#allocation6], %s208
        %s210 = sand.u32 %s72, 1
        %s211 = smul.addr %s210, 32
        %s212 = scalar_lea.vmem [#allocation5], %s211
        %p213 = pneg %p85
        %p214 = pneg %p82
        %p215 = pneg %p113
        %p216 = pneg %p110
        %s217 = sand.u32 %s100, 1
        %s218 = scalar_lea.sflag [#allocation4], %s217
        %s219 = sand.u32 %s100, 1
        %s220 = smul.addr %s219, 8
        %s221 = scalar_lea.vmem [#allocation7], %s220
        %v222 = vld [vmem:[%s187] sm:$0xff]
        %v223 = vld [vmem:[%s187 + $0x8] sm:$0xff]
        %v224 = vld [vmem:[%s187 + $0x10] sm:$0xff]
        %v225 = vld [vmem:[%s187 + $0x18] sm:$0xff]
        %v226 = vld [vmem:[%s196] sm:$0xff]
        %v227 = vld [vmem:[%s196 + $0x8] sm:$0xff]
        %v228 = vld [vmem:[%s196 + $0x10] sm:$0xff]
        %v229 = vld [vmem:[%s196 + $0x18] sm:$0xff]
        %v230 = vsub.f32 %v222, %v226
        %v231 = vsub.f32 %v223, %v227
        %v232 = vsub.f32 %v224, %v228
        %v233 = vsub.f32 %v225, %v229
        %v234 = vadd.f32 %v230, 1e-16
        %v235 = vadd.f32 %v231, 1e-16
        %v236 = vadd.f32 %v232, 1e-16
        %v237 = vadd.f32 %v233, 1e-16
        %v238 = vmul.f32 %v234, %v234
        %v239 = vmul.f32 %v235, %v235
        %v240 = vmul.f32 %v236, %v236
        %v241 = vmul.f32 %v237, %v237
        %v242 = vadd.f32 %v238, %v239
        %v243 = vadd.f32 %v242, %v240
        %v244 = vadd.f32 %v243, %v241
        %v245 = vrsqrt.pop %v244
        %v246 = vmul.f32 %v244, %v245
        %vm247 = vcmp.eq.f32.partialorder %v244, inf
        %v248 = vsel %vm247, %v244, %v246
        %vm249 = vcmp.eq.f32.partialorder %v244, 0.0
        %v250 = vand.u32 %v244, 2147483648
        %v251 = vsel %vm249, %v250, %v248
        %v252 = vlaneseq
        %v253 = vshrl.u32 %v252, 7
        %v254 = vlaneseq
        %v255 = vand.u32 %v254, 127
        %s256 = smul.u32 %s27, 8
        %v257 = vstv %s256
        %v258 = vadd.s32 %v257, %v253
        %v259 = vmul.u32 %v258, 128
        %v260 = vadd.s32 %v259, %v255
        %vm261 = vcmp.lt.s32.totalorder %v260, 256
        %v262 = vsel %vm261, %v251, 0.0
        %v263 = vadd.f32 %v262, 0.0
        %264 = vst [vmem:[%s221] sm:$0xff] %v263
        %s265 = sand.u32 %s100, 1
        %s266 = scalar_lea.sflag [#allocation4], %s265
        %s267 = sand.u32 %s100, 1
        %s268 = smul.addr %s267, 8
        %s269 = scalar_lea.vmem [#allocation7], %s268
        // Predicated region
        $region37: #{tpu_custom_call.1} parent=27 // pred_check
          %p270 = pneg %p110
        $region38: #{tpu_custom_call.1} parent=27 // pred_check_branch
          %272 = sbr.rel (%p270) target = $region40
        $region39: #{tpu_custom_call.1} parent=27 // pred_region
          %s274 = ssub.s32 128, 128
          %275 = vsyncadd %s266, %s274
          %s276 = sadd.s32 %s27, %s26
          %s277 = smul.addr %s276, 128
          %s278 = scalar_lea.hbm %s2, %s277
          %s280 = sshll.u32 %s269, 4
          %s281 = int_to_ptr.vmem [resolvable:$true] %s280
          %283 = dma.vmem_to_hbm [thread:$0]  %s281, 128, %s278, %s266
        $region40: #{tpu_custom_call.1} parent=27 // pred_fallthru
          _
      $region28: #{tpu_custom_call.1} parent=5 // pred_fallthru
        _
      %p284 = scmp.le.s32.totalorder 2, %s17
      // Predicated region
      $region41: #{tpu_custom_call.1} parent=5 // pred_check
        %p285 = pneg %p284
      $region42: #{tpu_custom_call.1} parent=5 // pred_check_branch
        %287 = sbr.rel (%p285) target = $region44
      $region43: #{tpu_custom_call.1} parent=5 // pred_region
        %s288 = ssub.s32 %s17, 2
        // Predicated region
        $region45: #{tpu_custom_call.1} parent=43 // pred_check
          %p289 = pneg %p116
        $region46: #{tpu_custom_call.1} parent=43 // pred_check_branch
          %291 = sbr.rel (%p289) target = $region48
        $region47: #{tpu_custom_call.1} parent=43 // pred_region
          %s292 = sand.u32 %s101, 1
          %s293 = scalar_lea.sflag [#allocation4], %s292
          %s294 = sand.u32 %s101, 1
          %s295 = smul.addr %s294, 8
          %s296 = scalar_lea.vmem [#allocation7], %s295
          %297 = dma.done %s293, 128
        $region48: #{tpu_custom_call.1} parent=43 // pred_fallthru
          _
      $region44: #{tpu_custom_call.1} parent=5 // pred_fallthru
        _
    $region6: #{tpu_custom_call.1} parent=1 // loop_footer
      %s21 = sadd.s32 1, %s17
    $region7: #{tpu_custom_call.1} parent=1 // loop_footer_branch
      %16 = sbr.rel target = $region3
    $region8: #{tpu_custom_call.1} parent=1 // loop_exit
      _
    %298 = vsyncpa [#allocation3], 1
    %s299 = scalar_lea.sflag [#allocation3], 1
    %300 = vsyncpa %s299, 1
    %301 = vsyncpa [#allocation6], 1
    %s302 = scalar_lea.sflag [#allocation6], 1
    %303 = vsyncpa %s302, 1
    %304 = vsyncpa [#allocation4], 1
    %s305 = scalar_lea.sflag [#allocation4], 1
    %306 = vsyncpa %s305, 1

</llo_original>
